<compile_context>
chip_gen: v5e
topology: v5e:2x2
jax: 0.10.0
libtpu: 0.0.40
codegen_flags: <defaults>
</compile_context>

<pallas_src>
import functools

import jax
import jax.numpy as jnp
import numpy as np
from jax.experimental import pallas as pl
from jax.experimental.pallas import tpu as pltpu


# --------------------------------------------------------------------------- kernel
def _drop_path_kernel(x_ref, m_ref, o_ref):
    """One (block_rows, block_cols) tile of the flattened (B, F) input.

    x_ref : VMEM (bm, bf)  input tile (x dtype)
    m_ref : VMEM (bm, 1)   per-sample keep/scale mask, float32
    o_ref : VMEM (bm, bf)  output tile (x dtype)
    """
    # f32 mask * (f32|bf16) x promotes to f32; cast back only at the store.
    o_ref[...] = (x_ref[...] * m_ref[...]).astype(o_ref.dtype)


# ------------------------------------------------------------------- block sizing
def _pick_blocks(B, F, dtype,
                 target_tile_bytes=4 * 1024 * 1024,
                 ragged_vmem_budget_bytes=12 * 1024 * 1024):
    """Choose (block_rows, block_cols) for a memory-bound streaming multiply."""
    itemsize = np.dtype(dtype).itemsize
    # Sublane packing: 8 rows for 32-bit, 16 for 16-bit, 32 for 8-bit dtypes.
    sub = max(8, 32 // itemsize)

    if B <= sub:
        rows = B                                   # full extent (always legal)
    else:
        rows = min(256, (B // sub) * sub)          # sublane-packing aligned

    if F % 128 == 0:
        cols = max(128, ((target_tile_bytes // max(rows * itemsize, 1)) // 128) * 128)
        cols = min(F, cols)
    else:
        # Ragged lane dim: take the whole feature axis as one lane-dense block and
        # shrink the row block so the double-buffered in+out footprint (~4x tile)
        # stays inside a conservative per-generation VMEM budget.
        cols = F
        max_rows = max(1, ragged_vmem_budget_bytes // (4 * F * itemsize))
        if max_rows < rows:
            rows = B if B <= 8 else max(8, (max_rows // 8) * 8)
    return rows, cols


# -------------------------------------------------------- raw pallas_call wrapper
def _masked_scale(x2d, mask_f32, block_rows=None, block_cols=None):
    """out[b, f] = x2d[b, f] * mask_f32[b, 0]   (cast back to x2d.dtype)."""
    B, F = x2d.shape
    itemsize = x2d.dtype.itemsize

    auto_rows, auto_cols = _pick_blocks(B, F, x2d.dtype)
    if block_rows is None:
        block_rows = auto_rows
    if block_cols is None:
        block_cols = auto_cols

    grid = (pl.cdiv(B, block_rows), pl.cdiv(F, block_cols))

    # Explicit VMEM budget: in + out tiles, double-buffered, plus the tiny mask,
    # plus headroom.  Keeps us well under v5e's 16 MiB scoped default and v7x's
    # 64 MiB physical VMEM while allowing the larger auto-picked tiles.
    tile_bytes = block_rows * block_cols * itemsize
    footprint = 2 * (2 * tile_bytes + block_rows * 4)
    vmem_limit = int(min(48 * 1024 * 1024, max(footprint + 8 * 1024 * 1024,
                                               16 * 1024 * 1024)))

    return pl.pallas_call(
        _drop_path_kernel,
        out_shape=jax.ShapeDtypeStruct((B, F), x2d.dtype),
        grid=grid,
        in_specs=[
            pl.BlockSpec((block_rows, block_cols), lambda i, j: (i, j)),
            pl.BlockSpec((block_rows, 1), lambda i, j: (i, 0)),
        ],
        out_specs=pl.BlockSpec((block_rows, block_cols), lambda i, j: (i, j)),
        compiler_params=pltpu.CompilerParams(
            dimension_semantics=("parallel", "parallel"),
            vmem_limit_bytes=vmem_limit),
        input_output_aliases={0: 0},     # donate x2d's buffer to the output
        cost_estimate=pl.CostEstimate(
            flops=B * F, transcendentals=0,
            bytes_accessed=2 * B * F * itemsize + B * 4),
    )(x2d, mask_f32)


# -------------------------------------------------------------- custom VJP wrapper
@functools.partial(jax.custom_vjp, nondiff_argnums=(2, 3))
def _apply_row_mask(x2d, mask_f32, block_rows, block_cols):
    return _masked_scale(x2d, mask_f32, block_rows, block_cols)


def _apply_row_mask_fwd(x2d, mask_f32, block_rows, block_cols):
    return _masked_scale(x2d, mask_f32, block_rows, block_cols), mask_f32


def _apply_row_mask_bwd(block_rows, block_cols, mask_f32, g):
    # Backward reuses the identical per-sample mask (same kernel).  The mask is a
    # non-trainable random draw, so its cotangent is zero.
    return _masked_scale(g, mask_f32, block_rows, block_cols), jnp.zeros_like(mask_f32)


_apply_row_mask.defvjp(_apply_row_mask_fwd, _apply_row_mask_bwd)


# ------------------------------------------------------------------- public entry
def drop_path_pallas(x, *, drop_prob=0.0, training=False, scale_by_keep=True,
                     key=None, block_rows=None, block_cols=None):
    """DropPath / stochastic depth: per-sample drop of the residual branch."""
    if drop_prob == 0.0 or not training:
        return x                                   # identity, like the PyTorch module
    keep_prob = 1.0 - drop_prob
    if keep_prob <= 0.0:
        return jnp.zeros_like(x)                   # everything dropped, no scaling

    if key is None:
        key = jax.random.PRNGKey(0)

    B = x.shape[0]
    # Per-sample Bernoulli(keep_prob) mask in full f32 precision, scaled by
    # 1/keep_prob when requested (matches torch's bernoulli_().div_(keep_prob)).
    keep = jax.random.bernoulli(key, keep_prob, (B, 1))
    scale = (1.0 / keep_prob) if scale_by_keep else 1.0
    mask_f32 = keep.astype(jnp.float32) * jnp.float32(scale)

    F = int(np.prod(x.shape[1:])) if x.ndim > 1 else 1
    x2d = x.reshape(B, F)
    out2d = _apply_row_mask(x2d, mask_f32, block_rows, block_cols)
    return out2d.reshape(x.shape)


# -------------------------------------------------------------------------- tests
if __name__ == "__main__":
    root = jax.random.PRNGKey(0)
    kx, kmask = jax.random.split(root)

    B, N, D = 8, 16, 64                            # ViT-style tokens; F = N*D = 1024
    x = jax.random.normal(kx, (B, N, D), dtype=jnp.float32)

    drop_prob = 0.25
    keep_prob = 1.0 - drop_prob

    # Training path (runs the Pallas kernel): per-sample stochastic depth.
    out = drop_path_pallas(x, drop_prob=drop_prob, training=True,
                           scale_by_keep=True, key=kmask)
    out = jax.block_until_ready(out)
    assert out.shape == x.shape and out.dtype == x.dtype

    x_np = np.asarray(jax.device_get(x))
    out_np = np.asarray(jax.device_get(out))

    # Every sample must be either fully dropped (all zeros) or scaled by 1/keep_prob.
    dropped_rows = []
    for b in range(B):
        dropped = np.allclose(out_np[b], 0.0)
        kept = np.allclose(out_np[b], x_np[b] / keep_prob, atol=1e-5, rtol=1e-5)
        assert dropped or kept, f"sample {b}: invalid drop-path output"
        dropped_rows.append(dropped)

    # The mask is computed outside the kernel, so the result must be identical for
    # any tiling of the (B, F) plane.
    out_tiled = jax.block_until_ready(
        drop_path_pallas(x, drop_prob=drop_prob, training=True,
                         scale_by_keep=True, key=kmask,
                         block_rows=8, block_cols=256))
    assert np.array_equal(out_np, np.asarray(jax.device_get(out_tiled)))

    # scale_by_keep=False: kept samples pass through unscaled.
    out_ns = jax.block_until_ready(
        drop_path_pallas(x, drop_prob=drop_prob, training=True,
                         scale_by_keep=False, key=kmask))
    out_ns_np = np.asarray(jax.device_get(out_ns))
    for b in range(B):
        assert (np.allclose(out_ns_np[b], 0.0)
                or np.allclose(out_ns_np[b], x_np[b], atol=1e-6, rtol=1e-6))

    # bf16 path: mask stays f32 through the multiply, output dtype preserved.
    xb = x.astype(jnp.bfloat16)
    outb = jax.block_until_ready(
        drop_path_pallas(xb, drop_prob=drop_prob, training=True,
                         scale_by_keep=True, key=kmask))
    assert outb.dtype == jnp.bfloat16 and outb.shape == xb.shape

    # Custom VJP: gradients reuse exactly the same per-sample mask.
    def loss(xx):
        return jnp.sum(drop_path_pallas(xx, drop_prob=drop_prob, training=True,
                                        scale_by_keep=True, key=kmask))
    g = jax.block_until_ready(jax.grad(loss)(x))
    g_np = np.asarray(jax.device_get(g))
    for b in range(B):
        expected = 0.0 if dropped_rows[b] else 1.0 / keep_prob
        assert np.allclose(g_np[b], expected, atol=1e-5), f"sample {b}: bad grad"

    # Identity paths: eval mode or drop_prob == 0 return x untouched (no kernel).
    assert drop_path_pallas(x, drop_prob=0.0, training=True) is x
    assert drop_path_pallas(x, drop_prob=drop_prob, training=False) is x

    print("KERNEL_OK")
</pallas_src>

<mosaic_0001>
module attributes {stable_mosaic.version = 11 : i64} {
  func.func @_drop_path_kernel(%arg0: i32, %arg1: i32, %arg2: memref<8x1024xf32, #tpu.memory_space<vmem>>, %arg3: memref<8x1xf32, #tpu.memory_space<vmem>>, %arg4: memref<8x1024xf32, #tpu.memory_space<vmem>>) attributes {dimension_semantics = [#tpu.dimension_semantics<parallel>, #tpu.dimension_semantics<parallel>], iteration_bounds = array<i64: 1, 1>, scalar_prefetch = 0 : i64, scratch_operands = 0 : i64, tpu.core_type = #tpu.core_type<tc>, window_params = [{transform_indices = @transform_0, window_bounds = array<i64: 8, 1024>}, {transform_indices = @transform_1, window_bounds = array<i64: 8, 1>}, {transform_indices = @transform_2, window_bounds = array<i64: 8, 1024>}]} {
    %c0 = arith.constant 0 : index
    %c0_0 = arith.constant 0 : index
    %0 = vector.load %arg2[%c0, %c0_0] : memref<8x1024xf32, #tpu.memory_space<vmem>>, vector<8x1024xf32>
    %c0_1 = arith.constant 0 : index
    %c0_2 = arith.constant 0 : index
    %1 = vector.load %arg3[%c0_1, %c0_2] : memref<8x1xf32, #tpu.memory_space<vmem>>, vector<8x1xf32>
    %2 = vector.broadcast %1 : vector<8x1xf32> to vector<8x1024xf32>
    %3 = arith.mulf %0, %2 : vector<8x1024xf32>
    %c0_3 = arith.constant 0 : index
    %c0_4 = arith.constant 0 : index
    %4 = vector.load %arg4[%c0_3, %c0_4] : memref<8x1024xf32, #tpu.memory_space<vmem>>, vector<8x1024xf32>
    tpu.vector_store %arg4[%c0_3, %c0_4], %3 {strides = array<i32>} : memref<8x1024xf32, #tpu.memory_space<vmem>>, vector<8x1024xf32>,
    return
  }
  func.func @transform_0(%arg0: i32, %arg1: i32) -> (i32, i32) {
    %c0_i32 = arith.constant 0 : i32
    return %arg0, %arg1 : i32, i32
  }
  func.func @transform_1(%arg0: i32, %arg1: i32) -> (i32, i32) {
    %c0_i32 = arith.constant 0 : i32
    %c0_i32_0 = arith.constant 0 : i32
    return %arg0, %c0_i32 : i32, i32
  }
  func.func @transform_2(%arg0: i32, %arg1: i32) -> (i32, i32) {
    %c0_i32 = arith.constant 0 : i32
    return %arg0, %arg1 : i32, i32
  }
}

</mosaic_0001>

<llo_original>
// kernel: tpu_custom_call.1
$region0: #{tpu_custom_call.1}
  #allocation0 [shape = 'u32[]', space=smem, size = 0x4, offset = 0x4, fixed_abs, tag = 'smem constant byte address 0x4 - core index']
  #allocation1 [shape = 'u32[72,128]{1,0:T(1,128)}', space=vmem, size = 0x9000, scoped, tag = 'internal scratch']
  %s0 = inlined_call_operand.hbm [shape: f32[8,1024], index: 0, kind: input, shape index: {}, may-alias: {0,2}]
  %s1 = inlined_call_operand.vmem [shape: f32[8,1], index: 1, kind: input, shape index: {}]
  %s2 = inlined_call_operand.hbm [shape: f32[8,1024], index: 2, kind: output, shape index: {}, may-alias: {0,2}]
  %s3 = sld [smem:[#allocation0]]
  $region22: #{tpu_custom_call.1} parent=0
    _
  %s5 = ssub.s32 1, %s3
  %s6 = scalar_select 0, %s5, %s3
  $region1: #{tpu_custom_call.1} parent=0
    #allocation2 [shape = 'u8[32768]{0}', space=vmem, size = 0x8000, scoped, tag = 'input window, operand 0, single buffered']
    #allocation3 [shape = 's32[1]{0}', space=sflag, size = 0x4, scoped, tag = 'scoped memory for tpu_custom_call.1']
    #allocation4 [shape = 's32[1]{0}', space=sflag, size = 0x4, scoped, tag = 'scoped memory for tpu_custom_call.1']
    #allocation5 [shape = 'u8[32768]{0}', space=vmem, size = 0x8000, scoped, tag = 'output window, operand 0, single buffered']
    %7 = vsyncpa [#allocation3], 0
    %8 = vsyncpa [#allocation4], 0
    // Predicated region
    $region2: #{tpu_custom_call.1} parent=1 // pred_check
      _
    $region3: #{tpu_custom_call.1} parent=1 // pred_check_branch
      %10 = sbr.rel (0) target = $region5
    $region4: #{tpu_custom_call.1} parent=1 // pred_region
      %12 = vsyncadd [#allocation3], 0
      %s14 = sshll.u32 %s0, 4
      %s15 = int_to_ptr.hbm [resolvable:$true] %s14
      %s16 = sshll.u32 [#allocation2], 4
      %s17 = int_to_ptr.vmem [resolvable:$true] %s16
      %19 = dma.hbm_to_vmem [thread:$0]  %s15, 1024, %s17, [#allocation3]
    $region5: #{tpu_custom_call.1} parent=1 // pred_fallthru
      _
    // Predicated region
    $region6: #{tpu_custom_call.1} parent=1 // pred_check
      _
    $region7: #{tpu_custom_call.1} parent=1 // pred_check_branch
      %21 = sbr.rel (0) target = $region9
    $region8: #{tpu_custom_call.1} parent=1 // pred_region
      _
    $region9: #{tpu_custom_call.1} parent=1 // pred_fallthru
      _
    // Predicated region
    $region10: #{tpu_custom_call.1} parent=1 // pred_check
      _
    $region11: #{tpu_custom_call.1} parent=1 // pred_check_branch
      %23 = sbr.rel (0) target = $region13
    $region12: #{tpu_custom_call.1} parent=1 // pred_region
      %25 = dma.done [#allocation3], 1024
    $region13: #{tpu_custom_call.1} parent=1 // pred_fallthru
      _
    %v26 = vld [vmem:[#allocation2] sm:$0xff]
    %v27 = vld [vmem:[#allocation2 + $0x8] sm:$0xff]
    %v28 = vld [vmem:[#allocation2 + $0x10] sm:$0xff]
    %v29 = vld [vmem:[#allocation2 + $0x18] sm:$0xff]
    %v30 = vld [vmem:[#allocation2 + $0x20] sm:$0xff]
    %v31 = vld [vmem:[#allocation2 + $0x28] sm:$0xff]
    %v32 = vld [vmem:[#allocation2 + $0x30] sm:$0xff]
    %v33 = vld [vmem:[#allocation2 + $0x38] sm:$0xff]
    %v34 = vld [vmem:[%s1] sm:$0xff]
    %36 = vset.pattern.permute.xlu0 0
    %37 = vperm.xlu0 %36, %v34
    %v38 = vpop.permute.xlu0 %37
    %v40 = vmul.f32 %v26, %v38
    %v41 = vmul.f32 %v27, %v38
    %v42 = vmul.f32 %v28, %v38
    %v43 = vmul.f32 %v29, %v38
    %v44 = vmul.f32 %v30, %v38
    %v45 = vmul.f32 %v31, %v38
    %v46 = vmul.f32 %v32, %v38
    %v47 = vmul.f32 %v33, %v38
    %48 = vst [vmem:[#allocation5] sm:$0xff] %v40
    %49 = vst [vmem:[#allocation5 + $0x8] sm:$0xff] %v41
    %50 = vst [vmem:[#allocation5 + $0x10] sm:$0xff] %v42
    %51 = vst [vmem:[#allocation5 + $0x18] sm:$0xff] %v43
    %52 = vst [vmem:[#allocation5 + $0x20] sm:$0xff] %v44
    %53 = vst [vmem:[#allocation5 + $0x28] sm:$0xff] %v45
    %54 = vst [vmem:[#allocation5 + $0x30] sm:$0xff] %v46
    %55 = vst [vmem:[#allocation5 + $0x38] sm:$0xff] %v47
    // Predicated region
    $region14: #{tpu_custom_call.1} parent=1 // pred_check
      _
    $region15: #{tpu_custom_call.1} parent=1 // pred_check_branch
      %57 = sbr.rel (0) target = $region17
    $region16: #{tpu_custom_call.1} parent=1 // pred_region
      %59 = vsyncadd [#allocation4], 0
      %s61 = sshll.u32 [#allocation5], 4
      %s62 = int_to_ptr.vmem [resolvable:$true] %s61
      %s63 = sshll.u32 %s2, 4
      %s64 = int_to_ptr.hbm [resolvable:$true] %s63
      %66 = dma.vmem_to_hbm [thread:$0]  %s62, 1024, %s64, [#allocation4]
    $region17: #{tpu_custom_call.1} parent=1 // pred_fallthru
      _
    // Predicated region
    $region18: #{tpu_custom_call.1} parent=1 // pred_check
      _
    $region19: #{tpu_custom_call.1} parent=1 // pred_check_branch
      %68 = sbr.rel (0) target = $region21
    $region20: #{tpu_custom_call.1} parent=1 // pred_region
      %70 = dma.done [#allocation4], 1024
    $region21: #{tpu_custom_call.1} parent=1 // pred_fallthru
      _
    %71 = vsyncpa [#allocation3], 1
    %72 = vsyncpa [#allocation4], 1

</llo_original>
